<compile_context>
chip_gen: v6e
topology: v6e:2x2x1
jax: 0.10.0
libtpu: 0.0.40
codegen_flags: <defaults>
</compile_context>

<pallas_src>
import functools

import jax
import jax.numpy as jnp
from jax.experimental import pallas as pl
from jax.experimental.pallas import tpu as pltpu

LN_EPS = 1e-5


def _layernorm_no_affine(h):
    # h arrives as f32 (MXU accumulator dtype); keep LN math in f32.
    mu = jnp.mean(h, axis=-1, keepdims=True)
    var = jnp.mean((h - mu) ** 2, axis=-1, keepdims=True)
    return (h - mu) * jax.lax.rsqrt(var + LN_EPS)


def encoder_kernel(xb_ref, w0_ref, b0_ref, w1_ref, b1_ref, wh_ref, bh_ref,
                   out_ref):
    # --- Layer 0: fused CondLayers (expr_L + cond_L as one matmul) ---
    h = jnp.dot(xb_ref[...], w0_ref[...], preferred_element_type=jnp.float32)
    h = h + b0_ref[...]                      # bias kept in f32
    h = jnp.maximum(_layernorm_no_affine(h), 0.0)

    # --- Layer 1: hidden Linear ---
    h = jnp.dot(h.astype(w1_ref.dtype), w1_ref[...],
                preferred_element_type=jnp.float32)
    h = h + b1_ref[...]
    h = jnp.maximum(_layernorm_no_affine(h), 0.0)

    # --- Fused mean / log_var heads: one matmul, one lane-denser store ---
    out = jnp.dot(h.astype(wh_ref.dtype), wh_ref[...],
                  preferred_element_type=jnp.float32)
    out_ref[...] = (out + bh_ref[...]).astype(out_ref.dtype)


def _round_up(n, m):
    return ((n + m - 1) // m) * m


def prepare_params(params, compute_dtype):
    """Wrapper-side layout plumbing (done once, outside the kernel):
    fuse CondLayers weights and the two head weights/biases."""
    w0 = jnp.concatenate([params["w0e"], params["w0c"]], axis=0)   # [N_IN+EMB, H1]
    wh = jnp.concatenate([params["wm"], params["wv"]], axis=1)     # [H2, 2*LATENT]
    bh = jnp.concatenate([params["bm"], params["bv"]], axis=1)     # [1, 2*LATENT]
    return {
        "w0": w0.astype(compute_dtype),
        "b0": params["b0"].astype(jnp.float32),
        "w1": params["w1"].astype(compute_dtype),
        "b1": params["b1"].astype(jnp.float32),
        "wh": wh.astype(compute_dtype),
        "bh": bh.astype(jnp.float32),
    }


@functools.partial(jax.jit, static_argnames=("tb", "compute_dtype"))
def encoder_forward(x, batch, params, *, tb=512, compute_dtype=jnp.float32):
    latent = params["wm"].shape[1]
    prep = prepare_params(params, compute_dtype)

    # torch.cat((x, batch), dim=-1) — done wrapper-side, once.
    xb = jnp.concatenate([x, batch], axis=-1)
    B, F_in = xb.shape

    # Batch tile: multiple of 8 (sublane), capped at tb; pad B up to a multiple.
    TB = min(_round_up(tb, 8), _round_up(B, 8))
    Bp = _round_up(B, TB)
    if Bp != B:
        xb = jnp.pad(xb, ((0, Bp - B), (0, 0)))
    xb = xb.astype(compute_dtype)

    two_latent = prep["wh"].shape[1]

    def resident(a):
        # Full-array block, constant block index: stays VMEM-resident.
        return pl.BlockSpec(a.shape, lambda i: (0,) * a.ndim)

    out = pl.pallas_call(
        encoder_kernel,
        out_shape=jax.ShapeDtypeStruct((Bp, two_latent), jnp.float32),
        grid=(Bp // TB,),
        in_specs=[
            pl.BlockSpec((TB, F_in), lambda i: (i, 0)),   # activations, tiled
            resident(prep["w0"]), resident(prep["b0"]),
            resident(prep["w1"]), resident(prep["b1"]),
            resident(prep["wh"]), resident(prep["bh"]),
        ],
        out_specs=pl.BlockSpec((TB, two_latent), lambda i: (i, 0)),
        compiler_params=pltpu.CompilerParams(
            dimension_semantics=("parallel",),
        ),
    )(xb, prep["w0"], prep["b0"], prep["w1"], prep["b1"],
      prep["wh"], prep["bh"])

    out = out[:B]
    return out[:, :latent], out[:, latent:]


# ----------------------------- references ----------------------------------

def encoder_reference_f32(x, batch, params):
    """Original, un-fused math in f32 (matches the PyTorch module)."""
    h = x @ params["w0e"] + params["b0"] + batch @ params["w0c"]
    h = jnp.maximum(_layernorm_no_affine(h), 0.0)
    h = h @ params["w1"] + params["b1"]
    h = jnp.maximum(_layernorm_no_affine(h), 0.0)
    return (h @ params["wm"] + params["bm"],
            h @ params["wv"] + params["bv"])


def encoder_reference_cast(x, batch, params, compute_dtype):
    """Same fused math / same quantization points as the kernel (for bf16)."""
    prep = prepare_params(params, compute_dtype)
    xb = jnp.concatenate([x, batch], axis=-1).astype(compute_dtype)
    h = jnp.dot(xb, prep["w0"], preferred_element_type=jnp.float32) + prep["b0"]
    h = jnp.maximum(_layernorm_no_affine(h), 0.0)
    h = jnp.dot(h.astype(compute_dtype), prep["w1"],
                preferred_element_type=jnp.float32) + prep["b1"]
    h = jnp.maximum(_layernorm_no_affine(h), 0.0)
    out = jnp.dot(h.astype(compute_dtype), prep["wh"],
                  preferred_element_type=jnp.float32) + prep["bh"]
    latent = params["wm"].shape[1]
    return out[:, :latent], out[:, latent:]


if __name__ == "__main__":
    # Small, module-consistent shapes.
    B, N_IN, EMB = 8, 32, 4          # batch, gene-expression dim, condition-embedding dim
    H1, H2, LATENT = 32, 32, 16      # layer_sizes = [N_IN, H1, H2], latent_dim

    key = jax.random.PRNGKey(0)
    ks = jax.random.split(key, 12)

    def init_w(k, fan_in, fan_out):
        bound = 1.0 / jnp.sqrt(fan_in)
        return jax.random.uniform(k, (fan_in, fan_out), jnp.float32, -bound, bound)

    def init_b(k, fan_in, fan_out):
        bound = 1.0 / jnp.sqrt(fan_in)
        return jax.random.uniform(k, (1, fan_out), jnp.float32, -bound, bound)

    params = {
        "w0e": init_w(ks[0], N_IN, H1),     # CondLayers.expr_L (bias=True)
        "b0":  init_b(ks[1], N_IN, H1),
        "w0c": init_w(ks[2], EMB, H1),      # CondLayers.cond_L (bias=False)
        "w1":  init_w(ks[3], H1, H2),       # hidden Linear
        "b1":  init_b(ks[4], H1, H2),
        "wm":  init_w(ks[5], H2, LATENT),   # mean_encoder
        "bm":  init_b(ks[6], H2, LATENT),
        "wv":  init_w(ks[7], H2, LATENT),   # log_var_encoder
        "bv":  init_b(ks[8], H2, LATENT),
    }

    x = jax.random.normal(ks[9], (B, N_IN), jnp.float32)
    batch_emb = jax.random.normal(ks[10], (B, EMB), jnp.float32)

    # --- f32 path, single tile ---
    means, log_vars = encoder_forward(x, batch_emb, params)
    jax.block_until_ready((means, log_vars))
    ref_m, ref_v = encoder_reference_f32(x, batch_emb, params)
    assert jnp.allclose(means, ref_m, atol=2e-5, rtol=1e-4)
    assert jnp.allclose(log_vars, ref_v, atol=2e-5, rtol=1e-4)

    # --- f32 path, ragged batch exercising tiling + padding (grid of 2) ---
    B2 = 13
    x2 = jax.random.normal(ks[11], (B2, N_IN), jnp.float32)
    b2 = jax.random.normal(ks[10], (B2, EMB), jnp.float32)
    means2, log_vars2 = encoder_forward(x2, b2, params, tb=8)
    jax.block_until_ready((means2, log_vars2))
    ref_m2, ref_v2 = encoder_reference_f32(x2, b2, params)
    assert means2.shape == (B2, LATENT) and log_vars2.shape == (B2, LATENT)
    assert jnp.allclose(means2, ref_m2, atol=2e-5, rtol=1e-4)
    assert jnp.allclose(log_vars2, ref_v2, atol=2e-5, rtol=1e-4)

    # --- bf16 dot operands, f32 accumulation / LayerNorm ---
    means_bf, log_vars_bf = encoder_forward(x, batch_emb, params,
                                            compute_dtype=jnp.bfloat16)
    jax.block_until_ready((means_bf, log_vars_bf))
    ref_mb, ref_vb = encoder_reference_cast(x, batch_emb, params, jnp.bfloat16)
    assert jnp.allclose(means_bf, ref_mb, atol=1e-3, rtol=1e-3)
    assert jnp.allclose(log_vars_bf, ref_vb, atol=1e-3, rtol=1e-3)

    print("KERNEL_OK")
</pallas_src>

<mosaic_0001>
module attributes {stable_mosaic.version = 11 : i64} {
  func.func @encoder_kernel(%arg0: i32, %arg1: memref<8x36xf32, #tpu.memory_space<vmem>>, %arg2: memref<36x32xf32, #tpu.memory_space<vmem>>, %arg3: memref<1x32xf32, #tpu.memory_space<vmem>>, %arg4: memref<32x32xf32, #tpu.memory_space<vmem>>, %arg5: memref<1x32xf32, #tpu.memory_space<vmem>>, %arg6: memref<32x32xf32, #tpu.memory_space<vmem>>, %arg7: memref<1x32xf32, #tpu.memory_space<vmem>>, %arg8: memref<8x32xf32, #tpu.memory_space<vmem>>) attributes {dimension_semantics = [#tpu.dimension_semantics<parallel>], iteration_bounds = array<i64: 1>, scalar_prefetch = 0 : i64, scratch_operands = 0 : i64, tpu.core_type = #tpu.core_type<tc>, window_params = [{transform_indices = @transform_0, window_bounds = array<i64: 8, 36>}, {pipeline_mode = #tpu.pipeline_mode<synchronous>, transform_indices = @transform_1, window_bounds = array<i64: 36, 32>}, {pipeline_mode = #tpu.pipeline_mode<synchronous>, transform_indices = @transform_2, window_bounds = array<i64: 1, 32>}, {pipeline_mode = #tpu.pipeline_mode<synchronous>, transform_indices = @transform_3, window_bounds = array<i64: 32, 32>}, {pipeline_mode = #tpu.pipeline_mode<synchronous>, transform_indices = @transform_4, window_bounds = array<i64: 1, 32>}, {pipeline_mode = #tpu.pipeline_mode<synchronous>, transform_indices = @transform_5, window_bounds = array<i64: 32, 32>}, {pipeline_mode = #tpu.pipeline_mode<synchronous>, transform_indices = @transform_6, window_bounds = array<i64: 1, 32>}, {transform_indices = @transform_7, window_bounds = array<i64: 8, 32>}]} {
    %c0 = arith.constant 0 : index
    %c0_0 = arith.constant 0 : index
    %0 = vector.load %arg1[%c0, %c0_0] : memref<8x36xf32, #tpu.memory_space<vmem>>, vector<8x36xf32>
    %c0_1 = arith.constant 0 : index
    %c0_2 = arith.constant 0 : index
    %1 = vector.load %arg2[%c0_1, %c0_2] : memref<36x32xf32, #tpu.memory_space<vmem>>, vector<36x32xf32>
    %cst = arith.constant dense<0.000000e+00> : vector<8x32xf32>
    %2 = tpu.matmul %0, %1, %cst {dimension_numbers = #tpu.dot_dimension_numbers<[1], [0], [0], [1], [0, 0, 1, 1], [], []>} : vector<8x36xf32>, vector<36x32xf32>, vector<8x32xf32> -> vector<8x32xf32>
    %c0_3 = arith.constant 0 : index
    %c0_4 = arith.constant 0 : index
    %3 = vector.load %arg3[%c0_3, %c0_4] : memref<1x32xf32, #tpu.memory_space<vmem>>, vector<1x32xf32>
    %4 = vector.broadcast %3 : vector<1x32xf32> to vector<8x32xf32>
    %5 = arith.addf %2, %4 : vector<8x32xf32>
    %cst_5 = arith.constant dense<0.000000e+00> : vector<8xf32>
    %6 = vector.multi_reduction <add>, %5, %cst_5 [1] : vector<8x32xf32> to vector<8xf32>
    %7 = vector.shape_cast %6 : vector<8xf32> to vector<8x1xf32>
    %cst_6 = arith.constant 3.200000e+01 : f32
    %8 = vector.broadcast %cst_6 : f32 to vector<8x1xf32>
    %9 = arith.divf %7, %8 : vector<8x1xf32>
    %10 = vector.broadcast %9 : vector<8x1xf32> to vector<8x32xf32>
    %11 = arith.subf %5, %10 : vector<8x32xf32>
    %12 = arith.mulf %11, %11 : vector<8x32xf32>
    %cst_7 = arith.constant dense<0.000000e+00> : vector<8xf32>
    %13 = vector.multi_reduction <add>, %12, %cst_7 [1] : vector<8x32xf32> to vector<8xf32>
    %14 = vector.shape_cast %13 : vector<8xf32> to vector<8x1xf32>
    %cst_8 = arith.constant 3.200000e+01 : f32
    %15 = vector.broadcast %cst_8 : f32 to vector<8x1xf32>
    %16 = arith.divf %14, %15 : vector<8x1xf32>
    %17 = vector.broadcast %9 : vector<8x1xf32> to vector<8x32xf32>
    %18 = arith.subf %5, %17 : vector<8x32xf32>
    %cst_9 = arith.constant 9.99999974E-6 : f32
    %19 = vector.broadcast %cst_9 : f32 to vector<8x1xf32>
    %20 = arith.addf %16, %19 : vector<8x1xf32>
    %21 = math.rsqrt %20 : vector<8x1xf32>
    %22 = vector.broadcast %21 : vector<8x1xf32> to vector<8x32xf32>
    %23 = arith.mulf %18, %22 : vector<8x32xf32>
    %cst_10 = arith.constant 0.000000e+00 : f32
    %24 = vector.broadcast %cst_10 : f32 to vector<8x32xf32>
    %25 = arith.maximumf %23, %24 : vector<8x32xf32>
    %c0_11 = arith.constant 0 : index
    %c0_12 = arith.constant 0 : index
    %26 = vector.load %arg4[%c0_11, %c0_12] : memref<32x32xf32, #tpu.memory_space<vmem>>, vector<32x32xf32>
    %cst_13 = arith.constant dense<0.000000e+00> : vector<8x32xf32>
    %27 = tpu.matmul %25, %26, %cst_13 {dimension_numbers = #tpu.dot_dimension_numbers<[1], [0], [0], [1], [0, 0, 1, 1], [], []>} : vector<8x32xf32>, vector<32x32xf32>, vector<8x32xf32> -> vector<8x32xf32>
    %c0_14 = arith.constant 0 : index
    %c0_15 = arith.constant 0 : index
    %28 = vector.load %arg5[%c0_14, %c0_15] : memref<1x32xf32, #tpu.memory_space<vmem>>, vector<1x32xf32>
    %29 = vector.broadcast %28 : vector<1x32xf32> to vector<8x32xf32>
    %30 = arith.addf %27, %29 : vector<8x32xf32>
    %cst_16 = arith.constant dense<0.000000e+00> : vector<8xf32>
    %31 = vector.multi_reduction <add>, %30, %cst_16 [1] : vector<8x32xf32> to vector<8xf32>
    %32 = vector.shape_cast %31 : vector<8xf32> to vector<8x1xf32>
    %cst_17 = arith.constant 3.200000e+01 : f32
    %33 = vector.broadcast %cst_17 : f32 to vector<8x1xf32>
    %34 = arith.divf %32, %33 : vector<8x1xf32>
    %35 = vector.broadcast %34 : vector<8x1xf32> to vector<8x32xf32>
    %36 = arith.subf %30, %35 : vector<8x32xf32>
    %37 = arith.mulf %36, %36 : vector<8x32xf32>
    %cst_18 = arith.constant dense<0.000000e+00> : vector<8xf32>
    %38 = vector.multi_reduction <add>, %37, %cst_18 [1] : vector<8x32xf32> to vector<8xf32>
    %39 = vector.shape_cast %38 : vector<8xf32> to vector<8x1xf32>
    %cst_19 = arith.constant 3.200000e+01 : f32
    %40 = vector.broadcast %cst_19 : f32 to vector<8x1xf32>
    %41 = arith.divf %39, %40 : vector<8x1xf32>
    %42 = vector.broadcast %34 : vector<8x1xf32> to vector<8x32xf32>
    %43 = arith.subf %30, %42 : vector<8x32xf32>
    %cst_20 = arith.constant 9.99999974E-6 : f32
    %44 = vector.broadcast %cst_20 : f32 to vector<8x1xf32>
    %45 = arith.addf %41, %44 : vector<8x1xf32>
    %46 = math.rsqrt %45 : vector<8x1xf32>
    %47 = vector.broadcast %46 : vector<8x1xf32> to vector<8x32xf32>
    %48 = arith.mulf %43, %47 : vector<8x32xf32>
    %cst_21 = arith.constant 0.000000e+00 : f32
    %49 = vector.broadcast %cst_21 : f32 to vector<8x32xf32>
    %50 = arith.maximumf %48, %49 : vector<8x32xf32>
    %c0_22 = arith.constant 0 : index
    %c0_23 = arith.constant 0 : index
    %51 = vector.load %arg6[%c0_22, %c0_23] : memref<32x32xf32, #tpu.memory_space<vmem>>, vector<32x32xf32>
    %cst_24 = arith.constant dense<0.000000e+00> : vector<8x32xf32>
    %52 = tpu.matmul %50, %51, %cst_24 {dimension_numbers = #tpu.dot_dimension_numbers<[1], [0], [0], [1], [0, 0, 1, 1], [], []>} : vector<8x32xf32>, vector<32x32xf32>, vector<8x32xf32> -> vector<8x32xf32>
    %c0_25 = arith.constant 0 : index
    %c0_26 = arith.constant 0 : index
    %53 = vector.load %arg7[%c0_25, %c0_26] : memref<1x32xf32, #tpu.memory_space<vmem>>, vector<1x32xf32>
    %54 = vector.broadcast %53 : vector<1x32xf32> to vector<8x32xf32>
    %55 = arith.addf %52, %54 : vector<8x32xf32>
    %c0_27 = arith.constant 0 : index
    %c0_28 = arith.constant 0 : index
    %56 = vector.load %arg8[%c0_27, %c0_28] : memref<8x32xf32, #tpu.memory_space<vmem>>, vector<8x32xf32>
    tpu.vector_store %arg8[%c0_27, %c0_28], %55 {strides = array<i32>} : memref<8x32xf32, #tpu.memory_space<vmem>>, vector<8x32xf32>,
    return
  }
  func.func @transform_0(%arg0: i32) -> (i32, i32) {
    %c0_i32 = arith.constant 0 : i32
    %c0_i32_0 = arith.constant 0 : i32
    return %arg0, %c0_i32 : i32, i32
  }
  func.func @transform_1(%arg0: i32) -> (i32, i32) {
    %c0_i32 = arith.constant 0 : i32
    %c0_i32_0 = arith.constant 0 : i32
    %c0_i32_1 = arith.constant 0 : i32
    return %c0_i32, %c0_i32_0 : i32, i32
  }
  func.func @transform_2(%arg0: i32) -> (i32, i32) {
    %c0_i32 = arith.constant 0 : i32
    %c0_i32_0 = arith.constant 0 : i32
    %c0_i32_1 = arith.constant 0 : i32
    return %c0_i32, %c0_i32_0 : i32, i32
  }
  func.func @transform_3(%arg0: i32) -> (i32, i32) {
    %c0_i32 = arith.constant 0 : i32
    %c0_i32_0 = arith.constant 0 : i32
    %c0_i32_1 = arith.constant 0 : i32
    return %c0_i32, %c0_i32_0 : i32, i32
  }
  func.func @transform_4(%arg0: i32) -> (i32, i32) {
    %c0_i32 = arith.constant 0 : i32
    %c0_i32_0 = arith.constant 0 : i32
    %c0_i32_1 = arith.constant 0 : i32
    return %c0_i32, %c0_i32_0 : i32, i32
  }
  func.func @transform_5(%arg0: i32) -> (i32, i32) {
    %c0_i32 = arith.constant 0 : i32
    %c0_i32_0 = arith.constant 0 : i32
    %c0_i32_1 = arith.constant 0 : i32
    return %c0_i32, %c0_i32_0 : i32, i32
  }
  func.func @transform_6(%arg0: i32) -> (i32, i32) {
    %c0_i32 = arith.constant 0 : i32
    %c0_i32_0 = arith.constant 0 : i32
    %c0_i32_1 = arith.constant 0 : i32
    return %c0_i32, %c0_i32_0 : i32, i32
  }
  func.func @transform_7(%arg0: i32) -> (i32, i32) {
    %c0_i32 = arith.constant 0 : i32
    %c0_i32_0 = arith.constant 0 : i32
    return %arg0, %c0_i32 : i32, i32
  }
}

</mosaic_0001>

<llo_original>
// kernel: encoder_forward.1
$region0: #{encoder_forward.1}
  #allocation0 [shape = 'u32[]', space=smem, size = 0x4, offset = 0x4, fixed_abs, tag = 'smem constant byte address 0x4 - core index']
  #allocation1 [shape = 'u32[144,128]{1,0:T(1,128)}', space=vmem, size = 0x12000, scoped, tag = 'internal scratch']
  %s0 = inlined_call_operand.vmem [shape: f32[8,36], index: 0, kind: input, shape index: {}]
  %s1 = inlined_call_operand.vmem [shape: f32[36,32], index: 1, kind: input, shape index: {}]
  %s2 = inlined_call_operand.vmem [shape: f32[1,32], index: 2, kind: input, shape index: {}]
  %s3 = inlined_call_operand.vmem [shape: f32[32,32], index: 3, kind: input, shape index: {}]
  %s4 = inlined_call_operand.vmem [shape: f32[1,32], index: 4, kind: input, shape index: {}]
  %s5 = inlined_call_operand.vmem [shape: f32[32,32], index: 5, kind: input, shape index: {}]
  %s6 = inlined_call_operand.vmem [shape: f32[1,32], index: 6, kind: input, shape index: {}]
  %s7 = inlined_call_operand.vmem [shape: f32[8,32], index: 7, kind: output, shape index: {}]
  %s8 = sld [smem:[#allocation0]]
  $region38: #{encoder_forward.1} parent=0
    _
  %s10 = ssub.s32 1, %s8
  %s11 = scalar_select 0, %s10, %s8
  // Predicated region
  $region2: #{encoder_forward.1} parent=0 // pred_check
    _
  $region3: #{encoder_forward.1} parent=0 // pred_check_branch
    %13 = sbr.rel (0) target = $region5
  $region4: #{encoder_forward.1} parent=0 // pred_region
    _
  $region5: #{encoder_forward.1} parent=0 // pred_fallthru
    _
  // Predicated region
  $region6: #{encoder_forward.1} parent=0 // pred_check
    _
  $region7: #{encoder_forward.1} parent=0 // pred_check_branch
    %15 = sbr.rel (0) target = $region9
  $region8: #{encoder_forward.1} parent=0 // pred_region
    _
  $region9: #{encoder_forward.1} parent=0 // pred_fallthru
    _
  // Predicated region
  $region10: #{encoder_forward.1} parent=0 // pred_check
    _
  $region11: #{encoder_forward.1} parent=0 // pred_check_branch
    %17 = sbr.rel (0) target = $region13
  $region12: #{encoder_forward.1} parent=0 // pred_region
    _
  $region13: #{encoder_forward.1} parent=0 // pred_fallthru
    _
  // Predicated region
  $region14: #{encoder_forward.1} parent=0 // pred_check
    _
  $region15: #{encoder_forward.1} parent=0 // pred_check_branch
    %19 = sbr.rel (0) target = $region17
  $region16: #{encoder_forward.1} parent=0 // pred_region
    _
  $region17: #{encoder_forward.1} parent=0 // pred_fallthru
    _
  // Predicated region
  $region18: #{encoder_forward.1} parent=0 // pred_check
    _
  $region19: #{encoder_forward.1} parent=0 // pred_check_branch
    %21 = sbr.rel (0) target = $region21
  $region20: #{encoder_forward.1} parent=0 // pred_region
    _
  $region21: #{encoder_forward.1} parent=0 // pred_fallthru
    _
  // Predicated region
  $region22: #{encoder_forward.1} parent=0 // pred_check
    _
  $region23: #{encoder_forward.1} parent=0 // pred_check_branch
    %23 = sbr.rel (0) target = $region25
  $region24: #{encoder_forward.1} parent=0 // pred_region
    _
  $region25: #{encoder_forward.1} parent=0 // pred_fallthru
    _
  // Predicated region
  $region26: #{encoder_forward.1} parent=0 // pred_check
    _
  $region27: #{encoder_forward.1} parent=0 // pred_check_branch
    %25 = sbr.rel (0) target = $region29
  $region28: #{encoder_forward.1} parent=0 // pred_region
    _
  $region29: #{encoder_forward.1} parent=0 // pred_fallthru
    _
  %v26 = vld [vmem:[%s0] sm:$0xff]
  %v27 = vld [vmem:[%s1] sm:$0xff]
  %v28 = vld [vmem:[%s1 + $0x8] sm:$0xff]
  %v29 = vld [vmem:[%s1 + $0x10] sm:$0xff]
  %v30 = vld [vmem:[%s1 + $0x18] sm:$0xff]
  %v31 = vld [vmem:[%s1 + $0x20] sm:$0xf]
  %v32 = vld [vmem:[%s2] sm:$0x1]
  %v34 = vlaneseq
  %v35 = vshrl.u32 %v34, 7
  %v36 = vsub.s32 0, %v35
  %v37 = vrot.slane %v32, %v36
  %vm39 = vcmask 293888
  %v41 = vsel %vm39, %v26, 0
  %vm43 = vcmask 1043456
  %v45 = vsel %vm43, %v31, 0
  %47 = vmatprep.subr.mxu0 0.0
  %48 = vmatpush1.msra.mxu0 0.0
  %49 = vmatprep.subr.mxu0 0.0
  %50 = vmatpush1.msra.mxu0 0.0
  %51 = vmatprep.subr.mxu0 0.0
  %52 = vmatpush1.msra.mxu0 0.0
  %53 = vmatprep.subr.mxu0 0.0
  %54 = vmatpush1.msra.mxu0 0.0
  %55 = vmatprep.subr.mxu0 0.0
  %56 = vmatpush1.msra.mxu0 0.0
  %57 = vmatprep.subr.mxu0 0.0
  %58 = vmatpush1.msra.mxu0 0.0
  %59 = vmatprep.subr.mxu0 0.0
  %60 = vmatpush1.msra.mxu0 0.0
  %61 = vmatprep.subr.mxu0 0.0
  %62 = vmatpush1.msra.mxu0 0.0
  %63 = vmatprep.subr.mxu0 0.0
  %64 = vmatpush1.msra.mxu0 0.0
  %65 = vmatprep.subr.mxu0 0.0
  %66 = vmatpush1.msra.mxu0 0.0
  %67 = vmatprep.subr.mxu0 0.0
  %68 = vmatpush1.msra.mxu0 0.0
  %69 = vmatprep.subr.mxu0 0.0
  %70 = vmatpush1.msra.mxu0 %v45
  %71 = vmatprep.subr.mxu0 0.0
  %72 = vmatpush1.msra.mxu0 %v30
  %73 = vmatprep.subr.mxu0 0.0
  %74 = vmatpush1.msra.mxu0 %v29
  %75 = vmatprep.subr.mxu0 0.0
  %76 = vmatpush1.msra.mxu0 %v28
  %77 = vmatprep.subr.mxu0 0.0
  %78 = vmatpush1.msra.mxu0 %v27
  %79 = vmatprep.subr.mxu0 0.0
  %80 = vmatpush2.msra.mxu0 0.0
  %81 = vmatprep.subr.mxu0 0.0
  %82 = vmatpush2.msra.mxu0 0.0
  %83 = vmatprep.subr.mxu0 0.0
  %84 = vmatpush2.msra.mxu0 0.0
  %85 = vmatprep.subr.mxu0 0.0
  %86 = vmatpush2.msra.mxu0 0.0
  %87 = vmatprep.subr.mxu0 0.0
  %88 = vmatpush2.msra.mxu0 0.0
  %89 = vmatprep.subr.mxu0 0.0
  %90 = vmatpush2.msra.mxu0 0.0
  %91 = vmatprep.subr.mxu0 0.0
  %92 = vmatpush2.msra.mxu0 0.0
  %93 = vmatprep.subr.mxu0 0.0
  %94 = vmatpush2.msra.mxu0 0.0
  %95 = vmatprep.subr.mxu0 0.0
  %96 = vmatpush2.msra.mxu0 0.0
  %97 = vmatprep.subr.mxu0 0.0
  %98 = vmatpush2.msra.mxu0 0.0
  %99 = vmatprep.subr.mxu0 0.0
  %100 = vmatpush2.msra.mxu0 0.0
  %101 = vmatprep.subr.mxu0 0.0
  %102 = vmatpush2.msra.mxu0 0.0
  %103 = vmatprep.subr.mxu0 0.0
  %104 = vmatpush2.msra.mxu0 0.0
  %105 = vmatprep.subr.mxu0 0.0
  %106 = vmatpush2.msra.mxu0 0.0
  %107 = vmatprep.subr.mxu0 0.0
  %108 = vmatpush2.msra.mxu0 0.0
  %109 = vmatprep.subr.mxu0 0.0
  %110 = vmatpush2.msra.mxu0 0.0
  %111 = vmatprep.mubr.f32.mxu0 0.0
  %112 = vmatmul.mubr.f32.gmra.mxu0 %v41
  %v113 = vpop.f32.mrf.mxu0
  %v114 = vadd.f32 %v37, %v113
  %v115 = vpop.f32.mrf.mxu0
  %116 = vdwg.mxu0
  %vm117 = vcmask 261120
  %v118 = vsel %vm117, %v114, 0.0
  %119 = vadd.xlane.f32.xlu0 %v118
  %v120 = vpop.xlane.xlu0 %119
  %v121 = vrcp.pop 32.0
  %v122 = vmul.f32 %v120, %v121
  %v123 = vsub.f32 %v114, %v122
  %v124 = vmul.f32 %v123, %v123
  %v125 = vsel %vm117, %v124, 0.0
  %126 = vadd.xlane.f32.xlu0 %v125
  %v127 = vpop.xlane.xlu0 %126
  %v128 = vmul.f32 %v127, %v121
  %v129 = vadd.f32 %v128, 1e-05
  %v130 = vrsqrt.pop %v129
  %v131 = vmul.f32 %v123, %v130
  %v132 = vmax.f32 %v131, 0.0
  %v133 = vld [vmem:[%s3] sm:$0xff]
  %v134 = vld [vmem:[%s3 + $0x8] sm:$0xff]
  %v135 = vld [vmem:[%s3 + $0x10] sm:$0xff]
  %v136 = vld [vmem:[%s3 + $0x18] sm:$0xff]
  %v137 = vld [vmem:[%s4] sm:$0x1]
  %v139 = vlaneseq
  %v140 = vshrl.u32 %v139, 7
  %v141 = vsub.s32 0, %v140
  %v142 = vrot.slane %v137, %v141
  %v145 = vsel %vm117, %v132, 0
  %147 = vmatprep.subr.mxu0 0.0
  %148 = vmatpush1.msra.mxu0 0.0
  %149 = vmatprep.subr.mxu0 0.0
  %150 = vmatpush1.msra.mxu0 0.0
  %151 = vmatprep.subr.mxu0 0.0
  %152 = vmatpush1.msra.mxu0 0.0
  %153 = vmatprep.subr.mxu0 0.0
  %154 = vmatpush1.msra.mxu0 0.0
  %155 = vmatprep.subr.mxu0 0.0
  %156 = vmatpush1.msra.mxu0 0.0
  %157 = vmatprep.subr.mxu0 0.0
  %158 = vmatpush1.msra.mxu0 0.0
  %159 = vmatprep.subr.mxu0 0.0
  %160 = vmatpush1.msra.mxu0 0.0
  %161 = vmatprep.subr.mxu0 0.0
  %162 = vmatpush1.msra.mxu0 0.0
  %163 = vmatprep.subr.mxu0 0.0
  %164 = vmatpush1.msra.mxu0 0.0
  %165 = vmatprep.subr.mxu0 0.0
  %166 = vmatpush1.msra.mxu0 0.0
  %167 = vmatprep.subr.mxu0 0.0
  %168 = vmatpush1.msra.mxu0 0.0
  %169 = vmatprep.subr.mxu0 0.0
  %170 = vmatpush1.msra.mxu0 0.0
  %171 = vmatprep.subr.mxu0 0.0
  %172 = vmatpush1.msra.mxu0 %v136
  %173 = vmatprep.subr.mxu0 0.0
  %174 = vmatpush1.msra.mxu0 %v135
  %175 = vmatprep.subr.mxu0 0.0
  %176 = vmatpush1.msra.mxu0 %v134
  %177 = vmatprep.subr.mxu0 0.0
  %178 = vmatpush1.msra.mxu0 %v133
  %179 = vmatprep.subr.mxu0 0.0
  %180 = vmatpush2.msra.mxu0 0.0
  %181 = vmatprep.subr.mxu0 0.0
  %182 = vmatpush2.msra.mxu0 0.0
  %183 = vmatprep.subr.mxu0 0.0
  %184 = vmatpush2.msra.mxu0 0.0
  %185 = vmatprep.subr.mxu0 0.0
  %186 = vmatpush2.msra.mxu0 0.0
  %187 = vmatprep.subr.mxu0 0.0
  %188 = vmatpush2.msra.mxu0 0.0
  %189 = vmatprep.subr.mxu0 0.0
  %190 = vmatpush2.msra.mxu0 0.0
  %191 = vmatprep.subr.mxu0 0.0
  %192 = vmatpush2.msra.mxu0 0.0
  %193 = vmatprep.subr.mxu0 0.0
  %194 = vmatpush2.msra.mxu0 0.0
  %195 = vmatprep.subr.mxu0 0.0
  %196 = vmatpush2.msra.mxu0 0.0
  %197 = vmatprep.subr.mxu0 0.0
  %198 = vmatpush2.msra.mxu0 0.0
  %199 = vmatprep.subr.mxu0 0.0
  %200 = vmatpush2.msra.mxu0 0.0
  %201 = vmatprep.subr.mxu0 0.0
  %202 = vmatpush2.msra.mxu0 0.0
  %203 = vmatprep.subr.mxu0 0.0
  %204 = vmatpush2.msra.mxu0 0.0
  %205 = vmatprep.subr.mxu0 0.0
  %206 = vmatpush2.msra.mxu0 0.0
  %207 = vmatprep.subr.mxu0 0.0
  %208 = vmatpush2.msra.mxu0 0.0
  %209 = vmatprep.subr.mxu0 0.0
  %210 = vmatpush2.msra.mxu0 0.0
  %211 = vmatprep.mubr.f32.mxu0 0.0
  %212 = vmatmul.mubr.f32.gmra.mxu0 %v145
  %v213 = vpop.f32.mrf.mxu0
  %v214 = vadd.f32 %v142, %v213
  %v215 = vpop.f32.mrf.mxu0
  %216 = vdwg.mxu0
  %v217 = vsel %vm117, %v214, 0.0
  %218 = vadd.xlane.f32.xlu0 %v217
  %v219 = vpop.xlane.xlu0 %218
  %v220 = vmul.f32 %v219, %v121
  %v221 = vsub.f32 %v214, %v220
  %v222 = vmul.f32 %v221, %v221
  %v223 = vsel %vm117, %v222, 0.0
  %224 = vadd.xlane.f32.xlu0 %v223
  %v225 = vpop.xlane.xlu0 %224
  %v226 = vmul.f32 %v225, %v121
  %v227 = vadd.f32 %v226, 1e-05
  %v228 = vrsqrt.pop %v227
  %v229 = vmul.f32 %v221, %v228
  %v230 = vmax.f32 %v229, 0.0
  %v231 = vld [vmem:[%s5] sm:$0xff]
  %v232 = vld [vmem:[%s5 + $0x8] sm:$0xff]
  %v233 = vld [vmem:[%s5 + $0x10] sm:$0xff]
  %v234 = vld [vmem:[%s5 + $0x18] sm:$0xff]
  %v235 = vld [vmem:[%s6] sm:$0x1]
  %v237 = vlaneseq
  %v238 = vshrl.u32 %v237, 7
  %v239 = vsub.s32 0, %v238
  %v240 = vrot.slane %v235, %v239
  %v243 = vsel %vm117, %v230, 0
  %245 = vmatprep.subr.mxu0 0.0
  %246 = vmatpush1.msra.mxu0 0.0
  %247 = vmatprep.subr.mxu0 0.0
  %248 = vmatpush1.msra.mxu0 0.0
  %249 = vmatprep.subr.mxu0 0.0
  %250 = vmatpush1.msra.mxu0 0.0
  %251 = vmatprep.subr.mxu0 0.0
  %252 = vmatpush1.msra.mxu0 0.0
  %253 = vmatprep.subr.mxu0 0.0
  %254 = vmatpush1.msra.mxu0 0.0
  %255 = vmatprep.subr.mxu0 0.0
  %256 = vmatpush1.msra.mxu0 0.0
  %257 = vmatprep.subr.mxu0 0.0
  %258 = vmatpush1.msra.mxu0 0.0
  %259 = vmatprep.subr.mxu0 0.0
  %260 = vmatpush1.msra.mxu0 0.0
  %261 = vmatprep.subr.mxu0 0.0
  %262 = vmatpush1.msra.mxu0 0.0
  %263 = vmatprep.subr.mxu0 0.0
  %264 = vmatpush1.msra.mxu0 0.0
  %265 = vmatprep.subr.mxu0 0.0
  %266 = vmatpush1.msra.mxu0 0.0
  %267 = vmatprep.subr.mxu0 0.0
  %268 = vmatpush1.msra.mxu0 0.0
  %269 = vmatprep.subr.mxu0 0.0
  %270 = vmatpush1.msra.mxu0 %v234
  %271 = vmatprep.subr.mxu0 0.0
  %272 = vmatpush1.msra.mxu0 %v233
  %273 = vmatprep.subr.mxu0 0.0
  %274 = vmatpush1.msra.mxu0 %v232
  %275 = vmatprep.subr.mxu0 0.0
  %276 = vmatpush1.msra.mxu0 %v231
  %277 = vmatprep.subr.mxu0 0.0
  %278 = vmatpush2.msra.mxu0 0.0
  %279 = vmatprep.subr.mxu0 0.0
  %280 = vmatpush2.msra.mxu0 0.0
  %281 = vmatprep.subr.mxu0 0.0
  %282 = vmatpush2.msra.mxu0 0.0
  %283 = vmatprep.subr.mxu0 0.0
  %284 = vmatpush2.msra.mxu0 0.0
  %285 = vmatprep.subr.mxu0 0.0
  %286 = vmatpush2.msra.mxu0 0.0
  %287 = vmatprep.subr.mxu0 0.0
  %288 = vmatpush2.msra.mxu0 0.0
  %289 = vmatprep.subr.mxu0 0.0
  %290 = vmatpush2.msra.mxu0 0.0
  %291 = vmatprep.subr.mxu0 0.0
  %292 = vmatpush2.msra.mxu0 0.0
  %293 = vmatprep.subr.mxu0 0.0
  %294 = vmatpush2.msra.mxu0 0.0
  %295 = vmatprep.subr.mxu0 0.0
  %296 = vmatpush2.msra.mxu0 0.0
  %297 = vmatprep.subr.mxu0 0.0
  %298 = vmatpush2.msra.mxu0 0.0
  %299 = vmatprep.subr.mxu0 0.0
  %300 = vmatpush2.msra.mxu0 0.0
  %301 = vmatprep.subr.mxu0 0.0
  %302 = vmatpush2.msra.mxu0 0.0
  %303 = vmatprep.subr.mxu0 0.0
  %304 = vmatpush2.msra.mxu0 0.0
  %305 = vmatprep.subr.mxu0 0.0
  %306 = vmatpush2.msra.mxu0 0.0
  %307 = vmatprep.subr.mxu0 0.0
  %308 = vmatpush2.msra.mxu0 0.0
  %309 = vmatprep.mubr.f32.mxu0 0.0
  %310 = vmatmul.mubr.f32.gmra.mxu0 %v243
  %v311 = vpop.f32.mrf.mxu0
  %v312 = vadd.f32 %v240, %v311
  %v313 = vpop.f32.mrf.mxu0
  %314 = vdwg.mxu0
  %315 = vst.msk [vmem:[%s7] sm:$0xff] %vm117, %v312
  // Predicated region
  $region30: #{encoder_forward.1} parent=0 // pred_check
    _
  $region31: #{encoder_forward.1} parent=0 // pred_check_branch
    %317 = sbr.rel (0) target = $region33
  $region32: #{encoder_forward.1} parent=0 // pred_region
    _
  $region33: #{encoder_forward.1} parent=0 // pred_fallthru
    _
  // Predicated region
  $region34: #{encoder_forward.1} parent=0 // pred_check
    _
  $region35: #{encoder_forward.1} parent=0 // pred_check_branch
    %319 = sbr.rel (0) target = $region37
  $region36: #{encoder_forward.1} parent=0 // pred_region
    _
  $region37: #{encoder_forward.1} parent=0 // pred_fallthru
    _

</llo_original>
